<compile_context>
chip_gen: v6e
topology: v6e:2x2x1
jax: 0.10.0
libtpu: 0.0.40
codegen_flags: <defaults>
</compile_context>

<pallas_src>
import functools

import jax
import jax.numpy as jnp
from jax.experimental import pallas as pl
from jax.experimental.pallas import tpu as pltpu


def _round_up(x, m):
    return (x + m - 1) // m * m


def _dilated_gated_block_kernel(x_ref, lh_ref, rh_ref, w_ref, b_ref, g_ref,
                                beta_ref, o_ref, win_ref, *,
                                K, dilation, H, pad, eps):
    """One (batch, time-tile) pair per grid step.

    x_ref    : (1, TT, C)      main input tile (also used as the residual)
    lh_ref   : (1, 1, H, C)    left halo rows (zeros at the sequence start)
    rh_ref   : (1, 1, H, C)    right halo rows (zeros at the sequence end)
    w_ref    : (K, C, 2C)      conv weights, tap-major, [in, out] per tap
    b_ref    : (1, 2C)         conv bias
    g_ref    : (1, C)          layernorm gamma
    beta_ref : (1, C)          layernorm beta
    o_ref    : (1, TT, C)      output tile
    win_ref  : (TT + 2H, C)    VMEM scratch: [left halo | main | right halo]
    """
    TT = x_ref.shape[1]
    C = x_ref.shape[2]

    # Assemble the conv window in VMEM.  H and TT are multiples of 8, so all
    # three stores below are sublane-aligned.
    win_ref[0:H, :] = lh_ref[0, 0]
    win_ref[H:H + TT, :] = x_ref[0]
    win_ref[H + TT:, :] = rh_ref[0, 0]

    # Dilated Conv1d as K shifted (TT, C) x (C, 2C) matmuls on the MXU.
    # Operands stay in their native dtype; only the accumulator is f32.
    base = H - pad
    acc = jnp.dot(win_ref[base:base + TT, :], w_ref[0],
                  preferred_element_type=jnp.float32)
    acc = acc + b_ref[...].astype(jnp.float32)          # (1, 2C) broadcasts
    for j in range(1, K):
        s = base + j * dilation
        acc = acc + jnp.dot(win_ref[s:s + TT, :], w_ref[j],
                            preferred_element_type=jnp.float32)

    # torch.chunk(_, 2, dim=channels): first C channels = filter, next C = gate.
    filt = acc[:, :C]
    gate = acc[:, C:]
    y = jax.nn.sigmoid(gate) * jnp.tanh(filt)           # gated activation (EUP)

    # Residual add (dropout = identity in eval) + LayerNorm over channels, f32.
    z = x_ref[0].astype(jnp.float32) + y
    mean = jnp.mean(z, axis=-1, keepdims=True)
    var = jnp.mean(jnp.square(z - mean), axis=-1, keepdims=True)
    zn = (z - mean) * jax.lax.rsqrt(var + eps)
    out = zn * g_ref[...].astype(jnp.float32) + beta_ref[...].astype(jnp.float32)

    o_ref[0] = out.astype(o_ref.dtype)


def dilated_conv_block(x, conv_weight, conv_bias, ln_gamma, ln_beta,
                       *, dilation=1, eps=1e-5, time_block=256):
    """x: [B, T, C]; conv_weight: [2C, C, K] (PyTorch Conv1d layout)."""
    B, T, C = x.shape
    out_ch, in_ch, K = conv_weight.shape
    assert in_ch == C and out_ch == 2 * C
    # 'same'-length output (and hence the residual add) requires odd K,
    # matching PyTorch's padding=(K-1)//2*dilation.
    assert K % 2 == 1, "DilatedConvBlock requires an odd kernel_size"

    pad = (K - 1) // 2 * dilation
    # Halo rows carried per tile, rounded up to a sublane multiple so the
    # window-assembly stores stay aligned.
    H = max(8, _round_up(pad, 8))

    # Time-tile size: multiple of 8, at least one halo deep.  256 rows keeps
    # per-step VMEM (2x in/out tiles + window + f32 acc) comfortably inside the
    # v7x 64 MiB budget even at C=512 f32; raise time_block on v5e/v6e.
    TT = max(8, _round_up(min(time_block, T), 8), H)
    T_r = _round_up(T, TT)
    num_t = T_r // TT

    dtype = x.dtype
    x_r = x if T_r == T else jnp.pad(x, ((0, 0), (0, T_r - T), (0, 0)))

    # Tiny per-tile halo arrays (H rows each).  Zeros at the sequence boundary
    # reproduce Conv1d's zero padding.  This (2*H/TT of the input) is the only
    # duplicated HBM data — no full padded copy, no second residual stream.
    xt = x_r.reshape(B, num_t, TT, C)
    lhalo = jnp.zeros((B, num_t, H, C), dtype)
    rhalo = jnp.zeros((B, num_t, H, C), dtype)
    if num_t > 1:
        lhalo = lhalo.at[:, 1:].set(xt[:, :-1, TT - H:, :])
        rhalo = rhalo.at[:, :-1].set(xt[:, 1:, :H, :])

    # Conv weights tap-major with [in, out] matrices (small one-off reorder),
    # cast to the activation dtype so the MXU sees its native (e.g. bf16) path.
    w = jnp.transpose(conv_weight, (2, 1, 0)).astype(dtype)      # (K, C, 2C)
    b2 = conv_bias.reshape(1, 2 * C)
    g2 = ln_gamma.reshape(1, C)
    beta2 = ln_beta.reshape(1, C)

    kernel = functools.partial(_dilated_gated_block_kernel,
                               K=K, dilation=dilation, H=H, pad=pad, eps=eps)

    itemsize = jnp.dtype(dtype).itemsize
    cost = pl.CostEstimate(
        flops=2 * B * T_r * C * (2 * C) * K + 12 * B * T_r * C,
        transcendentals=2 * B * T_r * C,                 # sigmoid + tanh
        bytes_accessed=(2 * B * T_r * C                  # x in + out
                        + 2 * B * num_t * H * C          # halos
                        + K * C * 2 * C + 6 * C) * itemsize,
    )

    out = pl.pallas_call(
        kernel,
        out_shape=jax.ShapeDtypeStruct((B, T_r, C), dtype),
        grid_spec=pltpu.PrefetchScalarGridSpec(
            num_scalar_prefetch=0,
            grid=(B, num_t),
            in_specs=[
                pl.BlockSpec((1, TT, C), lambda b, i: (b, i, 0)),       # x tile
                pl.BlockSpec((1, 1, H, C), lambda b, i: (b, i, 0, 0)),  # left halo
                pl.BlockSpec((1, 1, H, C), lambda b, i: (b, i, 0, 0)),  # right halo
                pl.BlockSpec((K, C, 2 * C), lambda b, i: (0, 0, 0)),    # conv W
                pl.BlockSpec((1, 2 * C), lambda b, i: (0, 0)),          # conv bias
                pl.BlockSpec((1, C), lambda b, i: (0, 0)),              # ln gamma
                pl.BlockSpec((1, C), lambda b, i: (0, 0)),              # ln beta
            ],
            out_specs=pl.BlockSpec((1, TT, C), lambda b, i: (b, i, 0)),
            scratch_shapes=[pltpu.VMEM((TT + 2 * H, C), dtype)],
        ),
        compiler_params=pltpu.CompilerParams(
            dimension_semantics=("parallel", "parallel"),
            vmem_limit_bytes=64 * 1024 * 1024,
        ),
        cost_estimate=cost,
    )(x_r, lhalo, rhalo, w, b2, g2, beta2)

    return out if T_r == T else out[:, :T, :]


def _reference(x, conv_weight, conv_bias, ln_gamma, ln_beta, dilation=1, eps=1e-5):
    """Pure-JAX reference matching the PyTorch forward (eval mode)."""
    B, T, C = x.shape
    K = conv_weight.shape[-1]
    pad = (K - 1) // 2 * dilation
    xp = jnp.pad(x, ((0, 0), (pad, pad), (0, 0)))
    acc = jnp.zeros((B, T, 2 * C), jnp.float32)
    for j in range(K):
        acc = acc + jnp.einsum('btc,oc->bto',
                               xp[:, j * dilation:j * dilation + T, :],
                               conv_weight[:, :, j])
    acc = acc + conv_bias
    filt, gate = acc[..., :C], acc[..., C:]
    y = jax.nn.sigmoid(gate) * jnp.tanh(filt)
    z = x + y
    mean = jnp.mean(z, axis=-1, keepdims=True)
    var = jnp.mean(jnp.square(z - mean), axis=-1, keepdims=True)
    return (z - mean) * jax.lax.rsqrt(var + eps) * ln_gamma + ln_beta


if __name__ == "__main__":
    # Small but representative: 2 time tiles per batch element so the halo
    # path is exercised; C=128 keeps the channel (lane) dim dense.
    B, T, C, K, dilation = 2, 64, 128, 3, 2

    key = jax.random.PRNGKey(0)
    kx, kw, kb = jax.random.split(key, 3)

    x = jax.random.normal(kx, (B, T, C), dtype=jnp.float32)
    # Deterministic synthetic parameters (shapes from nn.Conv1d / nn.LayerNorm).
    conv_weight = 0.1 * jax.random.normal(kw, (2 * C, C, K), dtype=jnp.float32)
    conv_bias = 0.1 * jax.random.normal(kb, (2 * C,), dtype=jnp.float32)
    ln_gamma = jnp.ones((C,), jnp.float32)
    ln_beta = jnp.zeros((C,), jnp.float32)

    out = dilated_conv_block(x, conv_weight, conv_bias, ln_gamma, ln_beta,
                             dilation=dilation, time_block=32)
    out = jax.block_until_ready(out)

    ref = _reference(x, conv_weight, conv_bias, ln_gamma, ln_beta, dilation)
    assert out.shape == (B, T, C)
    assert jnp.allclose(out, ref, atol=2e-3, rtol=2e-3), "mismatch vs reference"

    print("KERNEL_OK")
</pallas_src>

<mosaic_0001>
module attributes {stable_mosaic.version = 11 : i64} {
  func.func @_dilated_gated_block_kernel(%arg0: i32, %arg1: i32, %arg2: memref<1x32x128xf32, #tpu.memory_space<vmem>>, %arg3: memref<1x1x8x128xf32, #tpu.memory_space<vmem>>, %arg4: memref<1x1x8x128xf32, #tpu.memory_space<vmem>>, %arg5: memref<3x128x256xf32, #tpu.memory_space<vmem>>, %arg6: memref<1x256xf32, #tpu.memory_space<vmem>>, %arg7: memref<1x128xf32, #tpu.memory_space<vmem>>, %arg8: memref<1x128xf32, #tpu.memory_space<vmem>>, %arg9: memref<1x32x128xf32, #tpu.memory_space<vmem>>, %arg10: memref<48x128xf32, #tpu.memory_space<vmem>>) attributes {dimension_semantics = [#tpu.dimension_semantics<parallel>, #tpu.dimension_semantics<parallel>], iteration_bounds = array<i64: 2, 2>, scalar_prefetch = 0 : i64, scratch_operands = 1 : i64, tpu.core_type = #tpu.core_type<tc>, window_params = [{transform_indices = @transform_0, window_bounds = array<i64: 1, 32, 128>}, {transform_indices = @transform_1, window_bounds = array<i64: 1, 1, 8, 128>}, {transform_indices = @transform_2, window_bounds = array<i64: 1, 1, 8, 128>}, {pipeline_mode = #tpu.pipeline_mode<synchronous>, transform_indices = @transform_3, window_bounds = array<i64: 3, 128, 256>}, {pipeline_mode = #tpu.pipeline_mode<synchronous>, transform_indices = @transform_4, window_bounds = array<i64: 1, 256>}, {pipeline_mode = #tpu.pipeline_mode<synchronous>, transform_indices = @transform_5, window_bounds = array<i64: 1, 128>}, {pipeline_mode = #tpu.pipeline_mode<synchronous>, transform_indices = @transform_6, window_bounds = array<i64: 1, 128>}, {transform_indices = @transform_7, window_bounds = array<i64: 1, 32, 128>}]} {
    %c0 = arith.constant 0 : index
    %c0_0 = arith.constant 0 : index
    %c0_1 = arith.constant 0 : index
    %c0_2 = arith.constant 0 : index
    %0 = vector.load %arg3[%c0, %c0_0, %c0_1, %c0_2] : memref<1x1x8x128xf32, #tpu.memory_space<vmem>>, vector<1x1x8x128xf32>
    %1 = vector.shape_cast %0 : vector<1x1x8x128xf32> to vector<8x128xf32>
    %c0_3 = arith.constant 0 : index
    %c0_4 = arith.constant 0 : index
    %2 = vector.load %arg10[%c0_3, %c0_4] : memref<48x128xf32, #tpu.memory_space<vmem>>, vector<8x128xf32>
    tpu.vector_store %arg10[%c0_3, %c0_4], %1 {strides = array<i32>} : memref<48x128xf32, #tpu.memory_space<vmem>>, vector<8x128xf32>,
    %c0_5 = arith.constant 0 : index
    %c0_6 = arith.constant 0 : index
    %c0_7 = arith.constant 0 : index
    %3 = vector.load %arg2[%c0_5, %c0_6, %c0_7] : memref<1x32x128xf32, #tpu.memory_space<vmem>>, vector<1x32x128xf32>
    %4 = vector.shape_cast %3 : vector<1x32x128xf32> to vector<32x128xf32>
    %c8 = arith.constant 8 : index
    %c0_8 = arith.constant 0 : index
    %5 = vector.load %arg10[%c8, %c0_8] : memref<48x128xf32, #tpu.memory_space<vmem>>, vector<32x128xf32>
    tpu.vector_store %arg10[%c8, %c0_8], %4 {strides = array<i32>} : memref<48x128xf32, #tpu.memory_space<vmem>>, vector<32x128xf32>,
    %c0_9 = arith.constant 0 : index
    %c0_10 = arith.constant 0 : index
    %c0_11 = arith.constant 0 : index
    %c0_12 = arith.constant 0 : index
    %6 = vector.load %arg4[%c0_9, %c0_10, %c0_11, %c0_12] : memref<1x1x8x128xf32, #tpu.memory_space<vmem>>, vector<1x1x8x128xf32>
    %7 = vector.shape_cast %6 : vector<1x1x8x128xf32> to vector<8x128xf32>
    %c40 = arith.constant 40 : index
    %c0_13 = arith.constant 0 : index
    %8 = vector.load %arg10[%c40, %c0_13] : memref<48x128xf32, #tpu.memory_space<vmem>>, vector<8x128xf32>
    tpu.vector_store %arg10[%c40, %c0_13], %7 {strides = array<i32>} : memref<48x128xf32, #tpu.memory_space<vmem>>, vector<8x128xf32>,
    %c6 = arith.constant 6 : index
    %c0_14 = arith.constant 0 : index
    %9 = vector.load %arg10[%c6, %c0_14] : memref<48x128xf32, #tpu.memory_space<vmem>>, vector<32x128xf32>
    %c0_15 = arith.constant 0 : index
    %c0_16 = arith.constant 0 : index
    %c0_17 = arith.constant 0 : index
    %10 = vector.load %arg5[%c0_15, %c0_16, %c0_17] : memref<3x128x256xf32, #tpu.memory_space<vmem>>, vector<1x128x256xf32>
    %11 = vector.shape_cast %10 : vector<1x128x256xf32> to vector<128x256xf32>
    %cst = arith.constant dense<0.000000e+00> : vector<32x256xf32>
    %12 = tpu.matmul %9, %11, %cst {dimension_numbers = #tpu.dot_dimension_numbers<[1], [0], [0], [1], [0, 0, 1, 1], [], []>} : vector<32x128xf32>, vector<128x256xf32>, vector<32x256xf32> -> vector<32x256xf32>
    %c0_18 = arith.constant 0 : index
    %c0_19 = arith.constant 0 : index
    %13 = vector.load %arg6[%c0_18, %c0_19] : memref<1x256xf32, #tpu.memory_space<vmem>>, vector<1x256xf32>
    %14 = vector.broadcast %13 : vector<1x256xf32> to vector<32x256xf32>
    %15 = arith.addf %12, %14 : vector<32x256xf32>
    %c8_20 = arith.constant 8 : index
    %c0_21 = arith.constant 0 : index
    %16 = vector.load %arg10[%c8_20, %c0_21] : memref<48x128xf32, #tpu.memory_space<vmem>>, vector<32x128xf32>
    %c1 = arith.constant 1 : index
    %c0_22 = arith.constant 0 : index
    %c0_23 = arith.constant 0 : index
    %17 = vector.load %arg5[%c1, %c0_22, %c0_23] : memref<3x128x256xf32, #tpu.memory_space<vmem>>, vector<1x128x256xf32>
    %18 = vector.shape_cast %17 : vector<1x128x256xf32> to vector<128x256xf32>
    %cst_24 = arith.constant dense<0.000000e+00> : vector<32x256xf32>
    %19 = tpu.matmul %16, %18, %cst_24 {dimension_numbers = #tpu.dot_dimension_numbers<[1], [0], [0], [1], [0, 0, 1, 1], [], []>} : vector<32x128xf32>, vector<128x256xf32>, vector<32x256xf32> -> vector<32x256xf32>
    %20 = arith.addf %15, %19 : vector<32x256xf32>
    %c10 = arith.constant 10 : index
    %c0_25 = arith.constant 0 : index
    %21 = vector.load %arg10[%c10, %c0_25] : memref<48x128xf32, #tpu.memory_space<vmem>>, vector<32x128xf32>
    %c2 = arith.constant 2 : index
    %c0_26 = arith.constant 0 : index
    %c0_27 = arith.constant 0 : index
    %22 = vector.load %arg5[%c2, %c0_26, %c0_27] : memref<3x128x256xf32, #tpu.memory_space<vmem>>, vector<1x128x256xf32>
    %23 = vector.shape_cast %22 : vector<1x128x256xf32> to vector<128x256xf32>
    %cst_28 = arith.constant dense<0.000000e+00> : vector<32x256xf32>
    %24 = tpu.matmul %21, %23, %cst_28 {dimension_numbers = #tpu.dot_dimension_numbers<[1], [0], [0], [1], [0, 0, 1, 1], [], []>} : vector<32x128xf32>, vector<128x256xf32>, vector<32x256xf32> -> vector<32x256xf32>
    %25 = arith.addf %20, %24 : vector<32x256xf32>
    %26 = vector.extract_strided_slice %25 {offsets = [0, 0], sizes = [32, 128], strides = [1, 1]} : vector<32x256xf32> to vector<32x128xf32>
    %27 = vector.extract_strided_slice %25 {offsets = [0, 128], sizes = [32, 128], strides = [1, 1]} : vector<32x256xf32> to vector<32x128xf32>
    %28 = arith.negf %27 : vector<32x128xf32>
    %29 = math.exp %28 : vector<32x128xf32>
    %cst_29 = arith.constant 1.000000e+00 : f32
    %30 = vector.broadcast %cst_29 : f32 to vector<32x128xf32>
    %31 = arith.addf %30, %29 : vector<32x128xf32>
    %32 = arith.divf %30, %31 : vector<32x128xf32>
    %33 = math.tanh %26 : vector<32x128xf32>
    %34 = arith.mulf %32, %33 : vector<32x128xf32>
    %c0_30 = arith.constant 0 : index
    %c0_31 = arith.constant 0 : index
    %c0_32 = arith.constant 0 : index
    %35 = vector.load %arg2[%c0_30, %c0_31, %c0_32] : memref<1x32x128xf32, #tpu.memory_space<vmem>>, vector<1x32x128xf32>
    %36 = vector.shape_cast %35 : vector<1x32x128xf32> to vector<32x128xf32>
    %37 = arith.addf %36, %34 : vector<32x128xf32>
    %cst_33 = arith.constant dense<0.000000e+00> : vector<32xf32>
    %38 = vector.multi_reduction <add>, %37, %cst_33 [1] : vector<32x128xf32> to vector<32xf32>
    %39 = vector.shape_cast %38 : vector<32xf32> to vector<32x1xf32>
    %cst_34 = arith.constant 1.280000e+02 : f32
    %40 = vector.broadcast %cst_34 : f32 to vector<32x1xf32>
    %41 = arith.divf %39, %40 : vector<32x1xf32>
    %42 = vector.broadcast %41 : vector<32x1xf32> to vector<32x128xf32>
    %43 = arith.subf %37, %42 : vector<32x128xf32>
    %44 = arith.mulf %43, %43 : vector<32x128xf32>
    %cst_35 = arith.constant dense<0.000000e+00> : vector<32xf32>
    %45 = vector.multi_reduction <add>, %44, %cst_35 [1] : vector<32x128xf32> to vector<32xf32>
    %46 = vector.shape_cast %45 : vector<32xf32> to vector<32x1xf32>
    %cst_36 = arith.constant 1.280000e+02 : f32
    %47 = vector.broadcast %cst_36 : f32 to vector<32x1xf32>
    %48 = arith.divf %46, %47 : vector<32x1xf32>
    %49 = vector.broadcast %41 : vector<32x1xf32> to vector<32x128xf32>
    %50 = arith.subf %37, %49 : vector<32x128xf32>
    %cst_37 = arith.constant 9.99999974E-6 : f32
    %51 = vector.broadcast %cst_37 : f32 to vector<32x1xf32>
    %52 = arith.addf %48, %51 : vector<32x1xf32>
    %53 = math.rsqrt %52 : vector<32x1xf32>
    %54 = vector.broadcast %53 : vector<32x1xf32> to vector<32x128xf32>
    %55 = arith.mulf %50, %54 : vector<32x128xf32>
    %c0_38 = arith.constant 0 : index
    %c0_39 = arith.constant 0 : index
    %56 = vector.load %arg7[%c0_38, %c0_39] : memref<1x128xf32, #tpu.memory_space<vmem>>, vector<1x128xf32>
    %57 = vector.broadcast %56 : vector<1x128xf32> to vector<32x128xf32>
    %58 = arith.mulf %55, %57 : vector<32x128xf32>
    %c0_40 = arith.constant 0 : index
    %c0_41 = arith.constant 0 : index
    %59 = vector.load %arg8[%c0_40, %c0_41] : memref<1x128xf32, #tpu.memory_space<vmem>>, vector<1x128xf32>
    %60 = vector.broadcast %59 : vector<1x128xf32> to vector<32x128xf32>
    %61 = arith.addf %58, %60 : vector<32x128xf32>
    %c0_42 = arith.constant 0 : index
    %c0_43 = arith.constant 0 : index
    %c0_44 = arith.constant 0 : index
    %62 = vector.load %arg9[%c0_42, %c0_43, %c0_44] : memref<1x32x128xf32, #tpu.memory_space<vmem>>, vector<1x32x128xf32>
    %63 = vector.shape_cast %62 : vector<1x32x128xf32> to vector<32x128xf32>
    %64 = vector.shape_cast %61 : vector<32x128xf32> to vector<1x32x128xf32>
    tpu.vector_store %arg9[%c0_42, %c0_43, %c0_44], %64 {strides = array<i32>} : memref<1x32x128xf32, #tpu.memory_space<vmem>>, vector<1x32x128xf32>,
    return
  }
  func.func @transform_0(%arg0: i32, %arg1: i32) -> (i32, i32, i32) {
    %c0_i32 = arith.constant 0 : i32
    %c0_i32_0 = arith.constant 0 : i32
    return %arg0, %arg1, %c0_i32 : i32, i32, i32
  }
  func.func @transform_1(%arg0: i32, %arg1: i32) -> (i32, i32, i32, i32) {
    %c0_i32 = arith.constant 0 : i32
    %c0_i32_0 = arith.constant 0 : i32
    %c0_i32_1 = arith.constant 0 : i32
    return %arg0, %arg1, %c0_i32, %c0_i32_0 : i32, i32, i32, i32
  }
  func.func @transform_2(%arg0: i32, %arg1: i32) -> (i32, i32, i32, i32) {
    %c0_i32 = arith.constant 0 : i32
    %c0_i32_0 = arith.constant 0 : i32
    %c0_i32_1 = arith.constant 0 : i32
    return %arg0, %arg1, %c0_i32, %c0_i32_0 : i32, i32, i32, i32
  }
  func.func @transform_3(%arg0: i32, %arg1: i32) -> (i32, i32, i32) {
    %c0_i32 = arith.constant 0 : i32
    %c0_i32_0 = arith.constant 0 : i32
    %c0_i32_1 = arith.constant 0 : i32
    %c0_i32_2 = arith.constant 0 : i32
    return %c0_i32, %c0_i32_0, %c0_i32_1 : i32, i32, i32
  }
  func.func @transform_4(%arg0: i32, %arg1: i32) -> (i32, i32) {
    %c0_i32 = arith.constant 0 : i32
    %c0_i32_0 = arith.constant 0 : i32
    %c0_i32_1 = arith.constant 0 : i32
    return %c0_i32, %c0_i32_0 : i32, i32
  }
  func.func @transform_5(%arg0: i32, %arg1: i32) -> (i32, i32) {
    %c0_i32 = arith.constant 0 : i32
    %c0_i32_0 = arith.constant 0 : i32
    %c0_i32_1 = arith.constant 0 : i32
    return %c0_i32, %c0_i32_0 : i32, i32
  }
  func.func @transform_6(%arg0: i32, %arg1: i32) -> (i32, i32) {
    %c0_i32 = arith.constant 0 : i32
    %c0_i32_0 = arith.constant 0 : i32
    %c0_i32_1 = arith.constant 0 : i32
    return %c0_i32, %c0_i32_0 : i32, i32
  }
  func.func @transform_7(%arg0: i32, %arg1: i32) -> (i32, i32, i32) {
    %c0_i32 = arith.constant 0 : i32
    %c0_i32_0 = arith.constant 0 : i32
    return %arg0, %arg1, %c0_i32 : i32, i32, i32
  }
}

</mosaic_0001>

<llo_original>
// kernel: tpu_custom_call.1
$region0: #{tpu_custom_call.1}
  #allocation0 [shape = 'u32[]', space=smem, size = 0x4, offset = 0x4, fixed_abs, tag = 'smem constant byte address 0x4 - core index']
  #allocation1 [shape = 'u32[144,128]{1,0:T(1,128)}', space=vmem, size = 0x12000, scoped, tag = 'internal scratch']
  #allocation2 [shape = 'f32[48,128]{1,0:T(8,128)}', space=vmem, size = 0x6000, scoped, tag = 'scratch operand']
  %s0 = inlined_call_operand.hbm [shape: f32[2,64,128], index: 0, kind: input, shape index: {}]
  %s1 = inlined_call_operand.hbm [shape: f32[2,2,8,128], index: 1, kind: input, shape index: {}]
  %s2 = inlined_call_operand.hbm [shape: f32[2,2,8,128], index: 2, kind: input, shape index: {}]
  %s3 = inlined_call_operand.hbm [shape: f32[3,128,256], index: 3, kind: input, shape index: {}]
  %s4 = inlined_call_operand.vmem [shape: f32[1,256], index: 4, kind: input, shape index: {}]
  %s5 = inlined_call_operand.vmem [shape: f32[1,128], index: 5, kind: input, shape index: {}]
  %s6 = inlined_call_operand.vmem [shape: f32[1,128], index: 6, kind: input, shape index: {}]
  %s7 = inlined_call_operand.hbm [shape: f32[2,64,128], index: 7, kind: output, shape index: {}]
  %s8 = sld [smem:[#allocation0]]
  $region77: #{tpu_custom_call.1} parent=0
    _
  %s10 = ssub.s32 1, %s8
  %s11 = scalar_select 0, %s10, %s8
  $region1: #{tpu_custom_call.1} parent=0
    #allocation3 [shape = 'u8[32768]{0}', space=vmem, size = 0x8000, scoped, tag = 'input window, operand 0']
    #allocation4 [shape = 's32[2]{0}', space=sflag, size = 0x8, scoped, tag = 'scoped memory for tpu_custom_call.1']
    #allocation5 [shape = 's32[2]{0}', space=sflag, size = 0x8, scoped, tag = 'scoped memory for tpu_custom_call.1']
    #allocation6 [shape = 'u8[8192]{0}', space=vmem, size = 0x2000, scoped, tag = 'input window, operand 1']
    #allocation7 [shape = 's32[2]{0}', space=sflag, size = 0x8, scoped, tag = 'scoped memory for tpu_custom_call.1']
    #allocation8 [shape = 'u8[8192]{0}', space=vmem, size = 0x2000, scoped, tag = 'input window, operand 2']
    #allocation9 [shape = 'u8[393216]{0}', space=vmem, size = 0x60000, scoped, tag = 'input window, operand 3, single buffered']
    #allocation10 [shape = 's32[1]{0}', space=sflag, size = 0x4, scoped, tag = 'scoped memory for tpu_custom_call.1']
    #allocation11 [shape = 'u8[32768]{0}', space=vmem, size = 0x8000, scoped, tag = 'output window, operand 0']
    %12 = vsyncpa [#allocation4], 0
    %s13 = scalar_lea.sflag [#allocation4], 1
    %14 = vsyncpa %s13, 0
    %15 = vsyncpa [#allocation7], 0
    %s16 = scalar_lea.sflag [#allocation7], 1
    %17 = vsyncpa %s16, 0
    %18 = vsyncpa [#allocation10], 0
    %19 = vsyncpa [#allocation5], 0
    %s20 = scalar_lea.sflag [#allocation5], 1
    %21 = vsyncpa %s20, 0
    loop: start=0, step=1, limit=6
    $region2: #{tpu_custom_call.1} parent=1 // loop_pre_header
      _
    $region3: #{tpu_custom_call.1} parent=1 // loop_header
      %s23 = sphi 0, %s27
      %p24 = scmp.ge.s32.totalorder %s23, 6
      %s30 = sphi 0, %s42
      %s31 = sphi 0, %s38
      %s32 = sphi 0, %s30
      %s33 = sphi 0, %s31
      %s34 = sphi 0, %s32
      %s35 = sphi 0, %s33
      %s47 = sphi 0, %s49
      %s50 = sphi 0, %s47
      %s51 = sphi 0, %s50
      %s67 = sphi 0, %s51
      %s75 = sphi 0, %s77
      %s78 = sphi 0, %s75
      %s79 = sphi 0, %s78
      %s95 = sphi 0, %s79
      %s103 = sphi 0, %s105
      %s106 = sphi 0, %s103
      %s107 = sphi 0, %s106
      %s123 = sphi 0, %s107
      %s127 = sphi 0, %s127
      %s129 = sphi 0, %s127
      %s130 = sphi 0, %s129
      %s144 = sphi 0, %s130
      %s148 = sphi 0, %s148
      %s150 = sphi 0, %s148
      %s151 = sphi 0, %s150
      %s165 = sphi 0, %s151
      %s169 = sphi 0, %s169
      %s171 = sphi 0, %s169
      %s172 = sphi 0, %s171
      %s186 = sphi 0, %s172
      %s190 = sphi 0, %s190
      %s192 = sphi 0, %s190
      %s193 = sphi 0, %s192
      %s207 = sphi 0, %s193
      %s215 = sphi 0, %s217
      %s218 = sphi 0, %s215
      %s219 = sphi 0, %s218
      %s235 = sphi 0, %s219
    $region4: #{tpu_custom_call.1} parent=1 // loop_header_branch
      %26 = sbr.rel (%p24) target = $region8
    $region5: #{tpu_custom_call.1} parent=1 // loop_body
      %s28 = ssub.s32 %s23, 1
      %s29 = ssub.s32 %s23, 2
      %s36 = sadd.s32 1, %s31
      %p37 = scmp.ge.s32.totalorder %s36, 2
      %s38 = scalar_select %p37, 0, %s36
      %s39 = sadd.s32 1, %s30
      %s40 = scalar_select %p37, %s39, %s30
      %p41 = scmp.ge.s32.totalorder %s40, 2
      %s42 = scalar_select %p41, 0, %s40
      %s43 = ssub.s32 %s30, %s42
      %s44 = ssub.s32 %s31, %s38
      %s45 = sor.u32 %s43, %s44
      %p46 = scmp.eq.s32.totalorder %s45, 0
      %s48 = sadd.s32 %s47, 1
      %s49 = scalar_select %p46, %s47, %s48
      %p52 = pneg %p46
      %p53 = scmp.eq.s32.totalorder %s23, 3
      %p54 = por %p52, %p53
      %p55 = scmp.ne.s32.totalorder %s47, %s50
      %p56 = scmp.eq.s32.totalorder %s23, 0
      %p57 = por %p55, %p56
      %p58 = scmp.ne.s32.totalorder %s47, %s50
      %p59 = scmp.eq.s32.totalorder %s28, 3
      %p60 = por %p58, %p59
      %p61 = scmp.ne.s32.totalorder %s50, %s51
      %p62 = scmp.eq.s32.totalorder %s28, 0
      %p63 = por %p61, %p62
      %p64 = scmp.ne.s32.totalorder %s50, %s51
      %p65 = scmp.eq.s32.totalorder %s29, 3
      %p66 = por %p64, %p65
      %p68 = scmp.ne.s32.totalorder %s51, %s67
      %p69 = scmp.eq.s32.totalorder %s29, 0
      %p70 = por %p68, %p69
      %s71 = ssub.s32 %s30, %s42
      %s72 = ssub.s32 %s31, %s38
      %s73 = sor.u32 %s71, %s72
      %p74 = scmp.eq.s32.totalorder %s73, 0
      %s76 = sadd.s32 %s75, 1
      %s77 = scalar_select %p74, %s75, %s76
      %p80 = pneg %p74
      %p81 = scmp.eq.s32.totalorder %s23, 3
      %p82 = por %p80, %p81
      %p83 = scmp.ne.s32.totalorder %s75, %s78
      %p84 = scmp.eq.s32.totalorder %s23, 0
      %p85 = por %p83, %p84
      %p86 = scmp.ne.s32.totalorder %s75, %s78
      %p87 = scmp.eq.s32.totalorder %s28, 3
      %p88 = por %p86, %p87
      %p89 = scmp.ne.s32.totalorder %s78, %s79
      %p90 = scmp.eq.s32.totalorder %s28, 0
      %p91 = por %p89, %p90
      %p92 = scmp.ne.s32.totalorder %s78, %s79
      %p93 = scmp.eq.s32.totalorder %s29, 3
      %p94 = por %p92, %p93
      %p96 = scmp.ne.s32.totalorder %s79, %s95
      %p97 = scmp.eq.s32.totalorder %s29, 0
      %p98 = por %p96, %p97
      %s99 = ssub.s32 %s30, %s42
      %s100 = ssub.s32 %s31, %s38
      %s101 = sor.u32 %s99, %s100
      %p102 = scmp.eq.s32.totalorder %s101, 0
      %s104 = sadd.s32 %s103, 1
      %s105 = scalar_select %p102, %s103, %s104
      %p108 = pneg %p102
      %p109 = scmp.eq.s32.totalorder %s23, 3
      %p110 = por %p108, %p109
      %p111 = scmp.ne.s32.totalorder %s103, %s106
      %p112 = scmp.eq.s32.totalorder %s23, 0
      %p113 = por %p111, %p112
      %p114 = scmp.ne.s32.totalorder %s103, %s106
      %p115 = scmp.eq.s32.totalorder %s28, 3
      %p116 = por %p114, %p115
      %p117 = scmp.ne.s32.totalorder %s106, %s107
      %p118 = scmp.eq.s32.totalorder %s28, 0
      %p119 = por %p117, %p118
      %p120 = scmp.ne.s32.totalorder %s106, %s107
      %p121 = scmp.eq.s32.totalorder %s29, 3
      %p122 = por %p120, %p121
      %p124 = scmp.ne.s32.totalorder %s107, %s123
      %p125 = scmp.eq.s32.totalorder %s29, 0
      %p126 = por %p124, %p125
      %s128 = sadd.s32 %s127, 1
      %p131 = scmp.eq.s32.totalorder %s23, 3
      %p132 = scmp.ne.s32.totalorder %s127, %s129
      %p133 = scmp.eq.s32.totalorder %s23, 0
      %p134 = por %p132, %p133
      %p135 = scmp.ne.s32.totalorder %s127, %s129
      %p136 = scmp.eq.s32.totalorder %s28, 3
      %p137 = por %p135, %p136
      %p138 = scmp.ne.s32.totalorder %s129, %s130
      %p139 = scmp.eq.s32.totalorder %s28, 0
      %p140 = por %p138, %p139
      %p141 = scmp.ne.s32.totalorder %s129, %s130
      %p142 = scmp.eq.s32.totalorder %s29, 3
      %p143 = por %p141, %p142
      %p145 = scmp.ne.s32.totalorder %s130, %s144
      %p146 = scmp.eq.s32.totalorder %s29, 0
      %p147 = por %p145, %p146
      %s149 = sadd.s32 %s148, 1
      %p152 = scmp.eq.s32.totalorder %s23, 3
      %p153 = scmp.ne.s32.totalorder %s148, %s150
      %p154 = scmp.eq.s32.totalorder %s23, 0
      %p155 = por %p153, %p154
      %p156 = scmp.ne.s32.totalorder %s148, %s150
      %p157 = scmp.eq.s32.totalorder %s28, 3
      %p158 = por %p156, %p157
      %p159 = scmp.ne.s32.totalorder %s150, %s151
      %p160 = scmp.eq.s32.totalorder %s28, 0
      %p161 = por %p159, %p160
      %p162 = scmp.ne.s32.totalorder %s150, %s151
      %p163 = scmp.eq.s32.totalorder %s29, 3
      %p164 = por %p162, %p163
      %p166 = scmp.ne.s32.totalorder %s151, %s165
      %p167 = scmp.eq.s32.totalorder %s29, 0
      %p168 = por %p166, %p167
      %s170 = sadd.s32 %s169, 1
      %p173 = scmp.eq.s32.totalorder %s23, 3
      %p174 = scmp.ne.s32.totalorder %s169, %s171
      %p175 = scmp.eq.s32.totalorder %s23, 0
      %p176 = por %p174, %p175
      %p177 = scmp.ne.s32.totalorder %s169, %s171
      %p178 = scmp.eq.s32.totalorder %s28, 3
      %p179 = por %p177, %p178
      %p180 = scmp.ne.s32.totalorder %s171, %s172
      %p181 = scmp.eq.s32.totalorder %s28, 0
      %p182 = por %p180, %p181
      %p183 = scmp.ne.s32.totalorder %s171, %s172
      %p184 = scmp.eq.s32.totalorder %s29, 3
      %p185 = por %p183, %p184
      %p187 = scmp.ne.s32.totalorder %s172, %s186
      %p188 = scmp.eq.s32.totalorder %s29, 0
      %p189 = por %p187, %p188
      %s191 = sadd.s32 %s190, 1
      %p194 = scmp.eq.s32.totalorder %s23, 3
      %p195 = scmp.ne.s32.totalorder %s190, %s192
      %p196 = scmp.eq.s32.totalorder %s23, 0
      %p197 = por %p195, %p196
      %p198 = scmp.ne.s32.totalorder %s190, %s192
      %p199 = scmp.eq.s32.totalorder %s28, 3
      %p200 = por %p198, %p199
      %p201 = scmp.ne.s32.totalorder %s192, %s193
      %p202 = scmp.eq.s32.totalorder %s28, 0
      %p203 = por %p201, %p202
      %p204 = scmp.ne.s32.totalorder %s192, %s193
      %p205 = scmp.eq.s32.totalorder %s29, 3
      %p206 = por %p204, %p205
      %p208 = scmp.ne.s32.totalorder %s193, %s207
      %p209 = scmp.eq.s32.totalorder %s29, 0
      %p210 = por %p208, %p209
      %s211 = ssub.s32 %s30, %s42
      %s212 = ssub.s32 %s31, %s38
      %s213 = sor.u32 %s211, %s212
      %p214 = scmp.eq.s32.totalorder %s213, 0
      %s216 = sadd.s32 %s215, 1
      %s217 = scalar_select %p214, %s215, %s216
      %p220 = pneg %p214
      %p221 = scmp.eq.s32.totalorder %s23, 3
      %p222 = por %p220, %p221
      %p223 = scmp.ne.s32.totalorder %s215, %s218
      %p224 = scmp.eq.s32.totalorder %s23, 0
      %p225 = por %p223, %p224
      %p226 = scmp.ne.s32.totalorder %s215, %s218
      %p227 = scmp.eq.s32.totalorder %s28, 3
      %p228 = por %p226, %p227
      %p229 = scmp.ne.s32.totalorder %s218, %s219
      %p230 = scmp.eq.s32.totalorder %s28, 0
      %p231 = por %p229, %p230
      %p232 = scmp.ne.s32.totalorder %s218, %s219
      %p233 = scmp.eq.s32.totalorder %s29, 3
      %p234 = por %p232, %p233
      %p236 = scmp.ne.s32.totalorder %s219, %s235
      %p237 = scmp.eq.s32.totalorder %s29, 0
      %p238 = por %p236, %p237
      %p239 = scmp.le.s32.totalorder 1, %s23
      %p240 = scmp.lt.s32.totalorder %s23, 5
      %p241 = pnand %p239, %p240
      %p242 = pneg %p241
      // Predicated region
      $region9: #{tpu_custom_call.1} parent=5 // pred_check
        _
      $region10: #{tpu_custom_call.1} parent=5 // pred_check_branch
        %244 = sbr.rel (%p241) target = $region12
      $region11: #{tpu_custom_call.1} parent=5 // pred_region
        %s245 = ssub.s32 %s23, 1
        // Predicated region
        $region13: #{tpu_custom_call.1} parent=11 // pred_check
          %p246 = pneg %p140
        $region14: #{tpu_custom_call.1} parent=11 // pred_check_branch
          %248 = sbr.rel (%p246) target = $region16
        $region15: #{tpu_custom_call.1} parent=11 // pred_region
          %s250 = ssub.s32 12288, 12288
          %251 = vsyncadd [#allocation10], %s250
          %s252 = sshll.u32 [#allocation9], 4
          %s253 = int_to_ptr.vmem [resolvable:$true] %s252
          %258 = dma.hbm_to_vmem [thread:$0]  %s3, 12288, %s253, [#allocation10], 256, 256, 16
        $region16: #{tpu_custom_call.1} parent=11 // pred_fallthru
          _
        // Predicated region
        $region17: #{tpu_custom_call.1} parent=11 // pred_check
          %p259 = pneg %p161
        $region18: #{tpu_custom_call.1} parent=11 // pred_check_branch
          %261 = sbr.rel (%p259) target = $region20
        $region19: #{tpu_custom_call.1} parent=11 // pred_region
          _
        $region20: #{tpu_custom_call.1} parent=11 // pred_fallthru
          _
        // Predicated region
        $region21: #{tpu_custom_call.1} parent=11 // pred_check
          %p262 = pneg %p182
        $region22: #{tpu_custom_call.1} parent=11 // pred_check_branch
          %264 = sbr.rel (%p262) target = $region24
        $region23: #{tpu_custom_call.1} parent=11 // pred_region
          _
        $region24: #{tpu_custom_call.1} parent=11 // pred_fallthru
          _
        // Predicated region
        $region25: #{tpu_custom_call.1} parent=11 // pred_check
          %p265 = pneg %p203
        $region26: #{tpu_custom_call.1} parent=11 // pred_check_branch
          %267 = sbr.rel (%p265) target = $region28
        $region27: #{tpu_custom_call.1} parent=11 // pred_region
          _
        $region28: #{tpu_custom_call.1} parent=11 // pred_fallthru
          _
      $region12: #{tpu_custom_call.1} parent=5 // pred_fallthru
        _
      %p268 = scmp.lt.s32.totalorder %s23, 4
      // Predicated region
      $region29: #{tpu_custom_call.1} parent=5 // pred_check
        %p269 = pneg %p268
      $region30: #{tpu_custom_call.1} parent=5 // pred_check_branch
        %271 = sbr.rel (%p269) target = $region32
      $region31: #{tpu_custom_call.1} parent=5 // pred_region
        // Predicated region
        $region33: #{tpu_custom_call.1} parent=31 // pred_check
          %p272 = pneg %p57
        $region34: #{tpu_custom_call.1} parent=31 // pred_check_branch
          %274 = sbr.rel (%p272) target = $region36
        $region35: #{tpu_custom_call.1} parent=31 // pred_region
          %s275 = sand.u32 %s47, 1
          %s276 = scalar_lea.sflag [#allocation4], %s275
          %s277 = sand.u32 %s47, 1
          %s278 = smul.addr %s277, 32
          %s279 = scalar_lea.vmem [#allocation3], %s278
          %s280 = smul.u32 4, %s31
          %s282 = ssub.s32 512, 512
          %283 = vsyncadd %s276, %s282
          %s284 = smul.addr %s30, 8
          %s285 = sadd.s32 %s280, %s284
          %s286 = smul.addr %s285, 128
          %s287 = scalar_lea.hbm %s0, %s286
          %s288 = sshll.u32 %s279, 4
          %s289 = int_to_ptr.vmem [resolvable:$true] %s288
          %294 = dma.hbm_to_vmem [thread:$0]  %s287, 512, %s289, %s276, 128, 128, 8
        $region36: #{tpu_custom_call.1} parent=31 // pred_fallthru
          _
        // Predicated region
        $region37: #{tpu_custom_call.1} parent=31 // pred_check
          %p295 = pneg %p85
        $region38: #{tpu_custom_call.1} parent=31 // pred_check_branch
          %297 = sbr.rel (%p295) target = $region40
        $region39: #{tpu_custom_call.1} parent=31 // pred_region
          %s298 = sand.u32 %s23, 1
          %s299 = scalar_lea.sflag [#allocation7], %s298
          %s300 = sand.u32 %s75, 1
          %s301 = smul.addr %s300, 8
          %s302 = scalar_lea.vmem [#allocation6], %s301
          %s304 = ssub.s32 128, 128
          %305 = vsyncadd %s299, %s304
          %s306 = smul.addr %s30, 2
          %s307 = sadd.s32 %s31, %s306
          %s308 = smul.addr %s307, 128
          %s309 = scalar_lea.hbm %s1, %s308
          %s311 = sshll.u32 %s302, 4
          %s312 = int_to_ptr.vmem [resolvable:$true] %s311
          %314 = dma.hbm_to_vmem [thread:$0]  %s309, 128, %s312, %s299
        $region40: #{tpu_custom_call.1} parent=31 // pred_fallthru
          _
        // Predicated region
        $region41: #{tpu_custom_call.1} parent=31 // pred_check
          %p315 = pneg %p113
        $region42: #{tpu_custom_call.1} parent=31 // pred_check_branch
          %317 = sbr.rel (%p315) target = $region44
        $region43: #{tpu_custom_call.1} parent=31 // pred_region
          %s318 = sand.u32 %s23, 1
          %s319 = scalar_lea.sflag [#allocation7], %s318
          %s320 = sand.u32 %s103, 1
          %s321 = smul.addr %s320, 8
          %s322 = scalar_lea.vmem [#allocation8], %s321
          %s324 = ssub.s32 128, 128
          %325 = vsyncadd %s319, %s324
          %s326 = smul.addr %s30, 2
          %s327 = sadd.s32 %s31, %s326
          %s328 = smul.addr %s327, 128
          %s329 = scalar_lea.hbm %s2, %s328
          %s331 = sshll.u32 %s322, 4
          %s332 = int_to_ptr.vmem [resolvable:$true] %s331
          %334 = dma.hbm_to_vmem [thread:$0]  %s329, 128, %s332, %s319
        $region44: #{tpu_custom_call.1} parent=31 // pred_fallthru
          _
      $region32: #{tpu_custom_call.1} parent=5 // pred_fallthru
        _
      %p335 = scmp.le.s32.totalorder 1, %s23
      %p336 = scmp.lt.s32.totalorder %s23, 5
      %p337 = pnand %p335, %p336
      %p338 = pneg %p337
      // Predicated region
      $region45: #{tpu_custom_call.1} parent=5 // pred_check
        _
      $region46: #{tpu_custom_call.1} parent=5 // pred_check_branch
        %340 = sbr.rel (%p337) target = $region48
      $region47: #{tpu_custom_call.1} parent=5 // pred_region
        %s341 = ssub.s32 %s23, 1
        %s342 = sand.u32 %s50, 1
        %s343 = scalar_lea.sflag [#allocation4], %s342
        %s344 = sand.u32 %s50, 1
        %s345 = smul.addr %s344, 32
        %s346 = scalar_lea.vmem [#allocation3], %s345
        // Predicated region
        $region49: #{tpu_custom_call.1} parent=47 // pred_check
          %p347 = pneg %p63
        $region50: #{tpu_custom_call.1} parent=47 // pred_check_branch
          %349 = sbr.rel (%p347) target = $region52
        $region51: #{tpu_custom_call.1} parent=47 // pred_region
          %350 = dma.done %s343, 512
        $region52: #{tpu_custom_call.1} parent=47 // pred_fallthru
          _
        %s351 = sand.u32 %s28, 1
        %s352 = scalar_lea.sflag [#allocation7], %s351
        %s353 = sand.u32 %s78, 1
        %s354 = smul.addr %s353, 8
        %s355 = scalar_lea.vmem [#allocation6], %s354
        // Predicated region
        $region53: #{tpu_custom_call.1} parent=47 // pred_check
          %p356 = pneg %p91
        $region54: #{tpu_custom_call.1} parent=47 // pred_check_branch
          %358 = sbr.rel (%p356) target = $region56
        $region55: #{tpu_custom_call.1} parent=47 // pred_region
          %359 = dma.done %s352, 128
        $region56: #{tpu_custom_call.1} parent=47 // pred_fallthru
          _
        %s360 = sand.u32 %s28, 1
        %s361 = scalar_lea.sflag [#allocation7], %s360
        %s362 = sand.u32 %s106, 1
        %s363 = smul.addr %s362, 8
        %s364 = scalar_lea.vmem [#allocation8], %s363
        // Predicated region
        $region57: #{tpu_custom_call.1} parent=47 // pred_check
          %p365 = pneg %p119
        $region58: #{tpu_custom_call.1} parent=47 // pred_check_branch
          %367 = sbr.rel (%p365) target = $region60
        $region59: #{tpu_custom_call.1} parent=47 // pred_region
          %368 = dma.done %s361, 128
        $region60: #{tpu_custom_call.1} parent=47 // pred_fallthru
          _
        // Predicated region
        $region61: #{tpu_custom_call.1} parent=47 // pred_check
          %p369 = pneg %p140
        $region62: #{tpu_custom_call.1} parent=47 // pred_check_branch
          %371 = sbr.rel (%p369) target = $region64
        $region63: #{tpu_custom_call.1} parent=47 // pred_region
          %372 = dma.done [#allocation10], 12288
        $region64: #{tpu_custom_call.1} parent=47 // pred_fallthru
          _
        %s373 = sand.u32 %s50, 1
        %s374 = scalar_lea.sflag [#allocation4], %s373
        %s375 = sand.u32 %s50, 1
        %s376 = smul.addr %s375, 32
        %s377 = scalar_lea.vmem [#allocation3], %s376
        %p378 = pneg %p63
        %p379 = pneg %p60
        %s380 = sand.u32 %s28, 1
        %s381 = scalar_lea.sflag [#allocation7], %s380
        %s382 = sand.u32 %s78, 1
        %s383 = smul.addr %s382, 8
        %s384 = scalar_lea.vmem [#allocation6], %s383
        %p385 = pneg %p91
        %p386 = pneg %p88
        %s387 = sand.u32 %s28, 1
        %s388 = scalar_lea.sflag [#allocation7], %s387
        %s389 = sand.u32 %s106, 1
        %s390 = smul.addr %s389, 8
        %s391 = scalar_lea.vmem [#allocation8], %s390
        %p392 = pneg %p119
        %p393 = pneg %p116
        %p394 = pneg %p140
        %p395 = pneg %p137
        %p396 = pneg %p161
        %p397 = pneg %p158
        %p398 = pneg %p182
        %p399 = pneg %p179
        %p400 = pneg %p203
        %p401 = pneg %p200
        %p402 = pneg %p231
        %p403 = pneg %p228
        %s404 = sand.u32 %s218, 1
        %s405 = scalar_lea.sflag [#allocation5], %s404
        %s406 = sand.u32 %s218, 1
        %s407 = smul.addr %s406, 32
        %s408 = scalar_lea.vmem [#allocation11], %s407
        %s409 = smul.u32 4, %s33
        %s410 = smul.u32 4, %s33
        %v411 = vld [vmem:[%s355] sm:$0xff]
        %412 = vst [vmem:[#allocation2] sm:$0xff] %v411
        %v413 = vld [vmem:[%s346] sm:$0xff]
        %v414 = vld [vmem:[%s346 + $0x8] sm:$0xff]
        %v415 = vld [vmem:[%s346 + $0x10] sm:$0xff]
        %v416 = vld [vmem:[%s346 + $0x18] sm:$0xff]
        %417 = vst [vmem:[#allocation2 + $0x8] sm:$0xff] %v413
        %418 = vst [vmem:[#allocation2 + $0x10] sm:$0xff] %v414
        %419 = vst [vmem:[#allocation2 + $0x18] sm:$0xff] %v415
        %420 = vst [vmem:[#allocation2 + $0x20] sm:$0xff] %v416
        %v421 = vld [vmem:[%s364] sm:$0xff]
        %422 = vst [vmem:[#allocation2 + $0x28] sm:$0xff] %v421
        %v423 = vld [vmem:[#allocation2 + $0x6] sm:$0xff]
        %v424 = vld [vmem:[#allocation2 + $0xe] sm:$0xff]
        %v425 = vld [vmem:[#allocation2 + $0x16] sm:$0xff]
        %v426 = vld [vmem:[#allocation2 + $0x1e] sm:$0xff]
        %v427 = vld [vmem:[#allocation9] sm:$0xff]
        %v428 = vld [vmem:[#allocation9 + $0x8] sm:$0xff]
        %v429 = vld [vmem:[#allocation9 + $0x10] sm:$0xff]
        %v430 = vld [vmem:[#allocation9 + $0x18] sm:$0xff]
        %v431 = vld [vmem:[#allocation9 + $0x20] sm:$0xff]
        %v432 = vld [vmem:[#allocation9 + $0x28] sm:$0xff]
        %v433 = vld [vmem:[#allocation9 + $0x30] sm:$0xff]
        %v434 = vld [vmem:[#allocation9 + $0x38] sm:$0xff]
        %v435 = vld [vmem:[#allocation9 + $0x40] sm:$0xff]
        %v436 = vld [vmem:[#allocation9 + $0x48] sm:$0xff]
        %v437 = vld [vmem:[#allocation9 + $0x50] sm:$0xff]
        %v438 = vld [vmem:[#allocation9 + $0x58] sm:$0xff]
        %v439 = vld [vmem:[#allocation9 + $0x60] sm:$0xff]
        %v440 = vld [vmem:[#allocation9 + $0x68] sm:$0xff]
        %v441 = vld [vmem:[#allocation9 + $0x70] sm:$0xff]
        %v442 = vld [vmem:[#allocation9 + $0x78] sm:$0xff]
        %v443 = vld [vmem:[#allocation9 + $0x80] sm:$0xff]
        %v444 = vld [vmem:[#allocation9 + $0x88] sm:$0xff]
        %v445 = vld [vmem:[#allocation9 + $0x90] sm:$0xff]
        %v446 = vld [vmem:[#allocation9 + $0x98] sm:$0xff]
        %v447 = vld [vmem:[#allocation9 + $0xa0] sm:$0xff]
        %v448 = vld [vmem:[#allocation9 + $0xa8] sm:$0xff]
        %v449 = vld [vmem:[#allocation9 + $0xb0] sm:$0xff]
        %v450 = vld [vmem:[#allocation9 + $0xb8] sm:$0xff]
        %v451 = vld [vmem:[#allocation9 + $0xc0] sm:$0xff]
        %v452 = vld [vmem:[#allocation9 + $0xc8] sm:$0xff]
        %v453 = vld [vmem:[#allocation9 + $0xd0] sm:$0xff]
        %v454 = vld [vmem:[#allocation9 + $0xd8] sm:$0xff]
        %v455 = vld [vmem:[#allocation9 + $0xe0] sm:$0xff]
        %v456 = vld [vmem:[#allocation9 + $0xe8] sm:$0xff]
        %v457 = vld [vmem:[#allocation9 + $0xf0] sm:$0xff]
        %v458 = vld [vmem:[#allocation9 + $0xf8] sm:$0xff]
        %v459 = vld [vmem:[%s4] sm:$0x3]
        %v461 = vlaneseq
        %v462 = vshrl.u32 %v461, 7
        %v463 = vsub.s32 0, %v462
        %v464 = vrot.slane %v459, %v463
        %v465 = vlaneseq
        %v466 = vshrl.u32 %v465, 7
        %v467 = vsub.s32 1, %v466
        %v468 = vrot.slane %v459, %v467
        %471 = vmatprep.subr.mxu0 %v458
        %472 = vmatpush1.msra.mxu0 %v457
        %473 = vmatprep.subr.mxu0 %v456
        %474 = vmatpush1.msra.mxu0 %v455
        %475 = vmatprep.subr.mxu0 %v454
        %476 = vmatpush1.msra.mxu0 %v453
        %477 = vmatprep.subr.mxu0 %v452
        %478 = vmatpush1.msra.mxu0 %v451
        %479 = vmatprep.subr.mxu0 %v450
        %480 = vmatpush1.msra.mxu0 %v449
        %481 = vmatprep.subr.mxu0 %v448
        %482 = vmatpush1.msra.mxu0 %v447
        %483 = vmatprep.subr.mxu0 %v446
        %484 = vmatpush1.msra.mxu0 %v445
        %485 = vmatprep.subr.mxu0 %v444
        %486 = vmatpush1.msra.mxu0 %v443
        %487 = vmatprep.subr.mxu0 %v442
        %488 = vmatpush1.msra.mxu0 %v441
        %489 = vmatprep.subr.mxu0 %v440
        %490 = vmatpush1.msra.mxu0 %v439
        %491 = vmatprep.subr.mxu0 %v438
        %492 = vmatpush1.msra.mxu0 %v437
        %493 = vmatprep.subr.mxu0 %v436
        %494 = vmatpush1.msra.mxu0 %v435
        %495 = vmatprep.subr.mxu0 %v434
        %496 = vmatpush1.msra.mxu0 %v433
        %497 = vmatprep.subr.mxu0 %v432
        %498 = vmatpush1.msra.mxu0 %v431
        %499 = vmatprep.subr.mxu0 %v430
        %500 = vmatpush1.msra.mxu0 %v429
        %501 = vmatprep.subr.mxu0 %v428
        %502 = vmatpush1.msra.mxu0 %v427
        %503 = vmatprep.subr.mxu0 0.0
        %504 = vmatpush2.msra.mxu0 0.0
        %505 = vmatprep.subr.mxu0 0.0
        %506 = vmatpush2.msra.mxu0 0.0
        %507 = vmatprep.subr.mxu0 0.0
        %508 = vmatpush2.msra.mxu0 0.0
        %509 = vmatprep.subr.mxu0 0.0
        %510 = vmatpush2.msra.mxu0 0.0
        %511 = vmatprep.subr.mxu0 0.0
        %512 = vmatpush2.msra.mxu0 0.0
        %513 = vmatprep.subr.mxu0 0.0
        %514 = vmatpush2.msra.mxu0 0.0
        %515 = vmatprep.subr.mxu0 0.0
        %516 = vmatpush2.msra.mxu0 0.0
        %517 = vmatprep.subr.mxu0 0.0
        %518 = vmatpush2.msra.mxu0 0.0
        %519 = vmatprep.subr.mxu0 0.0
        %520 = vmatpush2.msra.mxu0 0.0
        %521 = vmatprep.subr.mxu0 0.0
        %522 = vmatpush2.msra.mxu0 0.0
        %523 = vmatprep.subr.mxu0 0.0
        %524 = vmatpush2.msra.mxu0 0.0
        %525 = vmatprep.subr.mxu0 0.0
        %526 = vmatpush2.msra.mxu0 0.0
        %527 = vmatprep.subr.mxu0 0.0
        %528 = vmatpush2.msra.mxu0 0.0
        %529 = vmatprep.subr.mxu0 0.0
        %530 = vmatpush2.msra.mxu0 0.0
        %531 = vmatprep.subr.mxu0 0.0
        %532 = vmatpush2.msra.mxu0 0.0
        %533 = vmatprep.subr.mxu0 0.0
        %534 = vmatpush2.msra.mxu0 0.0
        %535 = vmatprep.mubr.f32.mxu0 0.0
        %536 = vmatmul.mubr.f32.gmra.mxu0 %v423
        %v537 = vpop.f32.mrf.mxu0
        %v538 = vadd.f32 %v464, %v537
        %v539 = vpop.f32.mrf.mxu0
        %v540 = vadd.f32 %v468, %v539
        %541 = vmatprep.mubr.f32.mxu0 0.0
        %542 = vmatmul.mubr.f32.gmra.mxu0 %v424
        %v543 = vpop.f32.mrf.mxu0
        %v544 = vadd.f32 %v464, %v543
        %v545 = vpop.f32.mrf.mxu0
        %v546 = vadd.f32 %v468, %v545
        %547 = vmatprep.mubr.f32.mxu0 0.0
        %548 = vmatmul.mubr.f32.gmra.mxu0 %v425
        %v549 = vpop.f32.mrf.mxu0
        %v550 = vadd.f32 %v464, %v549
        %v551 = vpop.f32.mrf.mxu0
        %v552 = vadd.f32 %v468, %v551
        %553 = vmatprep.mubr.f32.mxu0 0.0
        %554 = vmatmul.mubr.f32.gmra.mxu0 %v426
        %v555 = vpop.f32.mrf.mxu0
        %v556 = vadd.f32 %v464, %v555
        %v557 = vpop.f32.mrf.mxu0
        %v558 = vadd.f32 %v468, %v557
        %559 = vdwg.mxu0
        %v560 = vld [vmem:[#allocation2 + $0x8] sm:$0xff]
        %v561 = vld [vmem:[#allocation2 + $0x10] sm:$0xff]
        %v562 = vld [vmem:[#allocation2 + $0x18] sm:$0xff]
        %v563 = vld [vmem:[#allocation2 + $0x20] sm:$0xff]
        %s564 = scalar_lea.vmem [#allocation9], 256
        %v565 = vld [vmem:[%s564] sm:$0xff]
        %v566 = vld [vmem:[%s564 + $0x8] sm:$0xff]
        %v567 = vld [vmem:[%s564 + $0x10] sm:$0xff]
        %v568 = vld [vmem:[%s564 + $0x18] sm:$0xff]
        %v569 = vld [vmem:[%s564 + $0x20] sm:$0xff]
        %v570 = vld [vmem:[%s564 + $0x28] sm:$0xff]
        %v571 = vld [vmem:[%s564 + $0x30] sm:$0xff]
        %v572 = vld [vmem:[%s564 + $0x38] sm:$0xff]
        %v573 = vld [vmem:[%s564 + $0x40] sm:$0xff]
        %v574 = vld [vmem:[%s564 + $0x48] sm:$0xff]
        %v575 = vld [vmem:[%s564 + $0x50] sm:$0xff]
        %v576 = vld [vmem:[%s564 + $0x58] sm:$0xff]
        %v577 = vld [vmem:[%s564 + $0x60] sm:$0xff]
        %v578 = vld [vmem:[%s564 + $0x68] sm:$0xff]
        %v579 = vld [vmem:[%s564 + $0x70] sm:$0xff]
        %v580 = vld [vmem:[%s564 + $0x78] sm:$0xff]
        %v581 = vld [vmem:[%s564 + $0x80] sm:$0xff]
        %v582 = vld [vmem:[%s564 + $0x88] sm:$0xff]
        %v583 = vld [vmem:[%s564 + $0x90] sm:$0xff]
        %v584 = vld [vmem:[%s564 + $0x98] sm:$0xff]
        %v585 = vld [vmem:[%s564 + $0xa0] sm:$0xff]
        %v586 = vld [vmem:[%s564 + $0xa8] sm:$0xff]
        %v587 = vld [vmem:[%s564 + $0xb0] sm:$0xff]
        %v588 = vld [vmem:[%s564 + $0xb8] sm:$0xff]
        %v589 = vld [vmem:[%s564 + $0xc0] sm:$0xff]
        %v590 = vld [vmem:[%s564 + $0xc8] sm:$0xff]
        %v591 = vld [vmem:[%s564 + $0xd0] sm:$0xff]
        %v592 = vld [vmem:[%s564 + $0xd8] sm:$0xff]
        %v593 = vld [vmem:[%s564 + $0xe0] sm:$0xff]
        %v594 = vld [vmem:[%s564 + $0xe8] sm:$0xff]
        %v595 = vld [vmem:[%s564 + $0xf0] sm:$0xff]
        %v596 = vld [vmem:[%s564 + $0xf8] sm:$0xff]
        %597 = vmatprep.subr.mxu0 %v596
        %598 = vmatpush1.msra.mxu0 %v595
        %599 = vmatprep.subr.mxu0 %v594
        %600 = vmatpush1.msra.mxu0 %v593
        %601 = vmatprep.subr.mxu0 %v592
        %602 = vmatpush1.msra.mxu0 %v591
        %603 = vmatprep.subr.mxu0 %v590
        %604 = vmatpush1.msra.mxu0 %v589
        %605 = vmatprep.subr.mxu0 %v588
        %606 = vmatpush1.msra.mxu0 %v587
        %607 = vmatprep.subr.mxu0 %v586
        %608 = vmatpush1.msra.mxu0 %v585
        %609 = vmatprep.subr.mxu0 %v584
        %610 = vmatpush1.msra.mxu0 %v583
        %611 = vmatprep.subr.mxu0 %v582
        %612 = vmatpush1.msra.mxu0 %v581
        %613 = vmatprep.subr.mxu0 %v580
        %614 = vmatpush1.msra.mxu0 %v579
        %615 = vmatprep.subr.mxu0 %v578
        %616 = vmatpush1.msra.mxu0 %v577
        %617 = vmatprep.subr.mxu0 %v576
        %618 = vmatpush1.msra.mxu0 %v575
        %619 = vmatprep.subr.mxu0 %v574
        %620 = vmatpush1.msra.mxu0 %v573
        %621 = vmatprep.subr.mxu0 %v572
        %622 = vmatpush1.msra.mxu0 %v571
        %623 = vmatprep.subr.mxu0 %v570
        %624 = vmatpush1.msra.mxu0 %v569
        %625 = vmatprep.subr.mxu0 %v568
        %626 = vmatpush1.msra.mxu0 %v567
        %627 = vmatprep.subr.mxu0 %v566
        %628 = vmatpush1.msra.mxu0 %v565
        %629 = vmatprep.subr.mxu0 0.0
        %630 = vmatpush2.msra.mxu0 0.0
        %631 = vmatprep.subr.mxu0 0.0
        %632 = vmatpush2.msra.mxu0 0.0
        %633 = vmatprep.subr.mxu0 0.0
        %634 = vmatpush2.msra.mxu0 0.0
        %635 = vmatprep.subr.mxu0 0.0
        %636 = vmatpush2.msra.mxu0 0.0
        %637 = vmatprep.subr.mxu0 0.0
        %638 = vmatpush2.msra.mxu0 0.0
        %639 = vmatprep.subr.mxu0 0.0
        %640 = vmatpush2.msra.mxu0 0.0
        %641 = vmatprep.subr.mxu0 0.0
        %642 = vmatpush2.msra.mxu0 0.0
        %643 = vmatprep.subr.mxu0 0.0
        %644 = vmatpush2.msra.mxu0 0.0
        %645 = vmatprep.subr.mxu0 0.0
        %646 = vmatpush2.msra.mxu0 0.0
        %647 = vmatprep.subr.mxu0 0.0
        %648 = vmatpush2.msra.mxu0 0.0
        %649 = vmatprep.subr.mxu0 0.0
        %650 = vmatpush2.msra.mxu0 0.0
        %651 = vmatprep.subr.mxu0 0.0
        %652 = vmatpush2.msra.mxu0 0.0
        %653 = vmatprep.subr.mxu0 0.0
        %654 = vmatpush2.msra.mxu0 0.0
        %655 = vmatprep.subr.mxu0 0.0
        %656 = vmatpush2.msra.mxu0 0.0
        %657 = vmatprep.subr.mxu0 0.0
        %658 = vmatpush2.msra.mxu0 0.0
        %659 = vmatprep.subr.mxu0 0.0
        %660 = vmatpush2.msra.mxu0 0.0
        %661 = vmatprep.mubr.f32.mxu0 0.0
        %662 = vmatmul.mubr.f32.gmra.mxu0 %v560
        %v663 = vpop.f32.mrf.mxu0
        %v664 = vadd.f32 0.0, %v663
        %v665 = vpop.f32.mrf.mxu0
        %v666 = vadd.f32 0.0, %v665
        %667 = vmatprep.mubr.f32.mxu0 0.0
        %668 = vmatmul.mubr.f32.gmra.mxu0 %v561
        %v669 = vpop.f32.mrf.mxu0
        %v670 = vadd.f32 0.0, %v669
        %v671 = vpop.f32.mrf.mxu0
        %v672 = vadd.f32 0.0, %v671
        %673 = vmatprep.mubr.f32.mxu0 0.0
        %674 = vmatmul.mubr.f32.gmra.mxu0 %v562
        %v675 = vpop.f32.mrf.mxu0
        %v676 = vadd.f32 0.0, %v675
        %v677 = vpop.f32.mrf.mxu0
        %v678 = vadd.f32 0.0, %v677
        %679 = vmatprep.mubr.f32.mxu0 0.0
        %680 = vmatmul.mubr.f32.gmra.mxu0 %v563
        %v681 = vpop.f32.mrf.mxu0
        %v682 = vadd.f32 0.0, %v681
        %v683 = vpop.f32.mrf.mxu0
        %v684 = vadd.f32 0.0, %v683
        %685 = vdwg.mxu0
        %v686 = vadd.f32 %v538, %v664
        %v687 = vadd.f32 %v540, %v666
        %v688 = vadd.f32 %v544, %v670
        %v689 = vadd.f32 %v546, %v672
        %v690 = vadd.f32 %v550, %v676
        %v691 = vadd.f32 %v552, %v678
        %v692 = vadd.f32 %v556, %v682
        %v693 = vadd.f32 %v558, %v684
        %v694 = vld [vmem:[#allocation2 + $0xa] sm:$0xff]
        %v695 = vld [vmem:[#allocation2 + $0x12] sm:$0xff]
        %v696 = vld [vmem:[#allocation2 + $0x1a] sm:$0xff]
        %v697 = vld [vmem:[#allocation2 + $0x22] sm:$0xff]
        %s698 = scalar_lea.vmem [#allocation9], 512
        %v699 = vld [vmem:[%s698] sm:$0xff]
        %v700 = vld [vmem:[%s698 + $0x8] sm:$0xff]
        %v701 = vld [vmem:[%s698 + $0x10] sm:$0xff]
        %v702 = vld [vmem:[%s698 + $0x18] sm:$0xff]
        %v703 = vld [vmem:[%s698 + $0x20] sm:$0xff]
        %v704 = vld [vmem:[%s698 + $0x28] sm:$0xff]
        %v705 = vld [vmem:[%s698 + $0x30] sm:$0xff]
        %v706 = vld [vmem:[%s698 + $0x38] sm:$0xff]
        %v707 = vld [vmem:[%s698 + $0x40] sm:$0xff]
        %v708 = vld [vmem:[%s698 + $0x48] sm:$0xff]
        %v709 = vld [vmem:[%s698 + $0x50] sm:$0xff]
        %v710 = vld [vmem:[%s698 + $0x58] sm:$0xff]
        %v711 = vld [vmem:[%s698 + $0x60] sm:$0xff]
        %v712 = vld [vmem:[%s698 + $0x68] sm:$0xff]
        %v713 = vld [vmem:[%s698 + $0x70] sm:$0xff]
        %v714 = vld [vmem:[%s698 + $0x78] sm:$0xff]
        %v715 = vld [vmem:[%s698 + $0x80] sm:$0xff]
        %v716 = vld [vmem:[%s698 + $0x88] sm:$0xff]
        %v717 = vld [vmem:[%s698 + $0x90] sm:$0xff]
        %v718 = vld [vmem:[%s698 + $0x98] sm:$0xff]
        %v719 = vld [vmem:[%s698 + $0xa0] sm:$0xff]
        %v720 = vld [vmem:[%s698 + $0xa8] sm:$0xff]
        %v721 = vld [vmem:[%s698 + $0xb0] sm:$0xff]
        %v722 = vld [vmem:[%s698 + $0xb8] sm:$0xff]
        %v723 = vld [vmem:[%s698 + $0xc0] sm:$0xff]
        %v724 = vld [vmem:[%s698 + $0xc8] sm:$0xff]
        %v725 = vld [vmem:[%s698 + $0xd0] sm:$0xff]
        %v726 = vld [vmem:[%s698 + $0xd8] sm:$0xff]
        %v727 = vld [vmem:[%s698 + $0xe0] sm:$0xff]
        %v728 = vld [vmem:[%s698 + $0xe8] sm:$0xff]
        %v729 = vld [vmem:[%s698 + $0xf0] sm:$0xff]
        %v730 = vld [vmem:[%s698 + $0xf8] sm:$0xff]
        %731 = vmatprep.subr.mxu0 %v730
        %732 = vmatpush1.msra.mxu0 %v729
        %733 = vmatprep.subr.mxu0 %v728
        %734 = vmatpush1.msra.mxu0 %v727
        %735 = vmatprep.subr.mxu0 %v726
        %736 = vmatpush1.msra.mxu0 %v725
        %737 = vmatprep.subr.mxu0 %v724
        %738 = vmatpush1.msra.mxu0 %v723
        %739 = vmatprep.subr.mxu0 %v722
        %740 = vmatpush1.msra.mxu0 %v721
        %741 = vmatprep.subr.mxu0 %v720
        %742 = vmatpush1.msra.mxu0 %v719
        %743 = vmatprep.subr.mxu0 %v718
        %744 = vmatpush1.msra.mxu0 %v717
        %745 = vmatprep.subr.mxu0 %v716
        %746 = vmatpush1.msra.mxu0 %v715
        %747 = vmatprep.subr.mxu0 %v714
        %748 = vmatpush1.msra.mxu0 %v713
        %749 = vmatprep.subr.mxu0 %v712
        %750 = vmatpush1.msra.mxu0 %v711
        %751 = vmatprep.subr.mxu0 %v710
        %752 = vmatpush1.msra.mxu0 %v709
        %753 = vmatprep.subr.mxu0 %v708
        %754 = vmatpush1.msra.mxu0 %v707
        %755 = vmatprep.subr.mxu0 %v706
        %756 = vmatpush1.msra.mxu0 %v705
        %757 = vmatprep.subr.mxu0 %v704
        %758 = vmatpush1.msra.mxu0 %v703
        %759 = vmatprep.subr.mxu0 %v702
        %760 = vmatpush1.msra.mxu0 %v701
        %761 = vmatprep.subr.mxu0 %v700
        %762 = vmatpush1.msra.mxu0 %v699
        %763 = vmatprep.subr.mxu0 0.0
        %764 = vmatpush2.msra.mxu0 0.0
        %765 = vmatprep.subr.mxu0 0.0
        %766 = vmatpush2.msra.mxu0 0.0
        %767 = vmatprep.subr.mxu0 0.0
        %768 = vmatpush2.msra.mxu0 0.0
        %769 = vmatprep.subr.mxu0 0.0
        %770 = vmatpush2.msra.mxu0 0.0
        %771 = vmatprep.subr.mxu0 0.0
        %772 = vmatpush2.msra.mxu0 0.0
        %773 = vmatprep.subr.mxu0 0.0
        %774 = vmatpush2.msra.mxu0 0.0
        %775 = vmatprep.subr.mxu0 0.0
        %776 = vmatpush2.msra.mxu0 0.0
        %777 = vmatprep.subr.mxu0 0.0
        %778 = vmatpush2.msra.mxu0 0.0
        %779 = vmatprep.subr.mxu0 0.0
        %780 = vmatpush2.msra.mxu0 0.0
        %781 = vmatprep.subr.mxu0 0.0
        %782 = vmatpush2.msra.mxu0 0.0
        %783 = vmatprep.subr.mxu0 0.0
        %784 = vmatpush2.msra.mxu0 0.0
        %785 = vmatprep.subr.mxu0 0.0
        %786 = vmatpush2.msra.mxu0 0.0
        %787 = vmatprep.subr.mxu0 0.0
        %788 = vmatpush2.msra.mxu0 0.0
        %789 = vmatprep.subr.mxu0 0.0
        %790 = vmatpush2.msra.mxu0 0.0
        %791 = vmatprep.subr.mxu0 0.0
        %792 = vmatpush2.msra.mxu0 0.0
        %793 = vmatprep.subr.mxu0 0.0
        %794 = vmatpush2.msra.mxu0 0.0
        %795 = vmatprep.mubr.f32.mxu0 0.0
        %796 = vmatmul.mubr.f32.gmra.mxu0 %v694
        %v797 = vpop.f32.mrf.mxu0
        %v798 = vadd.f32 0.0, %v797
        %v799 = vpop.f32.mrf.mxu0
        %v800 = vadd.f32 0.0, %v799
        %801 = vmatprep.mubr.f32.mxu0 0.0
        %802 = vmatmul.mubr.f32.gmra.mxu0 %v695
        %v803 = vpop.f32.mrf.mxu0
        %v804 = vadd.f32 0.0, %v803
        %v805 = vpop.f32.mrf.mxu0
        %v806 = vadd.f32 0.0, %v805
        %807 = vmatprep.mubr.f32.mxu0 0.0
        %808 = vmatmul.mubr.f32.gmra.mxu0 %v696
        %v809 = vpop.f32.mrf.mxu0
        %v810 = vadd.f32 0.0, %v809
        %v811 = vpop.f32.mrf.mxu0
        %v812 = vadd.f32 0.0, %v811
        %813 = vmatprep.mubr.f32.mxu0 0.0
        %814 = vmatmul.mubr.f32.gmra.mxu0 %v697
        %v815 = vpop.f32.mrf.mxu0
        %v816 = vadd.f32 0.0, %v815
        %v817 = vpop.f32.mrf.mxu0
        %v818 = vadd.f32 0.0, %v817
        %819 = vdwg.mxu0
        %v820 = vadd.f32 %v686, %v798
        %v821 = vadd.f32 %v687, %v800
        %v822 = vadd.f32 %v688, %v804
        %v823 = vadd.f32 %v689, %v806
        %v824 = vadd.f32 %v690, %v810
        %v825 = vadd.f32 %v691, %v812
        %v826 = vadd.f32 %v692, %v816
        %v827 = vadd.f32 %v693, %v818
        %v828 = vxor.u32 %v821, 2147483648
        %v829 = vxor.u32 %v823, 2147483648
        %v830 = vxor.u32 %v825, 2147483648
        %v831 = vxor.u32 %v827, 2147483648
        %v832 = vmul.f32 %v828, 1.442695
        %v833 = vpow.pop %v832
        %v834 = vmul.f32 %v829, 1.442695
        %v835 = vpow.pop %v834
        %v836 = vmul.f32 %v830, 1.442695
        %v837 = vpow.pop %v836
        %v838 = vmul.f32 %v831, 1.442695
        %v839 = vpow.pop %v838
        %v840 = vadd.f32 %v833, 1.0
        %v841 = vadd.f32 %v835, 1.0
        %v842 = vadd.f32 %v837, 1.0
        %v843 = vadd.f32 %v839, 1.0
        %v844 = vrcp.pop %v840
        %v845 = vmul.f32 1.0, %v844
        %v846 = vrcp.pop %v841
        %v847 = vmul.f32 1.0, %v846
        %v848 = vrcp.pop %v842
        %v849 = vmul.f32 1.0, %v848
        %v850 = vrcp.pop %v843
        %v851 = vmul.f32 1.0, %v850
        %v852 = vtanh.pop %v820
        %v853 = vtanh.pop %v822
        %v854 = vtanh.pop %v824
        %v855 = vtanh.pop %v826
        %v856 = vmul.f32 %v845, %v852
        %v857 = vmul.f32 %v847, %v853
        %v858 = vmul.f32 %v849, %v854
        %v859 = vmul.f32 %v851, %v855
        %v860 = vld [vmem:[%s346] sm:$0xff]
        %v861 = vld [vmem:[%s346 + $0x8] sm:$0xff]
        %v862 = vld [vmem:[%s346 + $0x10] sm:$0xff]
        %v863 = vld [vmem:[%s346 + $0x18] sm:$0xff]
        %v864 = vadd.f32 %v860, %v856
        %v865 = vadd.f32 %v861, %v857
        %v866 = vadd.f32 %v862, %v858
        %v867 = vadd.f32 %v863, %v859
        %868 = vadd.xlane.f32.xlu0 %v864
        %v869 = vpop.xlane.xlu0 %868
        %870 = vadd.xlane.f32.xlu0 %v865
        %v871 = vpop.xlane.xlu0 %870
        %872 = vadd.xlane.f32.xlu0 %v866
        %v873 = vpop.xlane.xlu0 %872
        %874 = vadd.xlane.f32.xlu0 %v867
        %v875 = vpop.xlane.xlu0 %874
        %v876 = vrcp.pop 128.0
        %v877 = vmul.f32 %v869, %v876
        %v878 = vmul.f32 %v871, %v876
        %v879 = vmul.f32 %v873, %v876
        %v880 = vmul.f32 %v875, %v876
        %v881 = vsub.f32 %v864, %v877
        %v882 = vsub.f32 %v865, %v878
        %v883 = vsub.f32 %v866, %v879
        %v884 = vsub.f32 %v867, %v880
        %v885 = vmul.f32 %v881, %v881
        %v886 = vmul.f32 %v882, %v882
        %v887 = vmul.f32 %v883, %v883
        %v888 = vmul.f32 %v884, %v884
        %889 = vadd.xlane.f32.xlu0 %v885
        %v890 = vpop.xlane.xlu0 %889
        %891 = vadd.xlane.f32.xlu0 %v886
        %v892 = vpop.xlane.xlu0 %891
        %893 = vadd.xlane.f32.xlu0 %v887
        %v894 = vpop.xlane.xlu0 %893
        %895 = vadd.xlane.f32.xlu0 %v888
        %v896 = vpop.xlane.xlu0 %895
        %v897 = vmul.f32 %v890, %v876
        %v898 = vmul.f32 %v892, %v876
        %v899 = vmul.f32 %v894, %v876
        %v900 = vmul.f32 %v896, %v876
        %v901 = vadd.f32 %v897, 1e-05
        %v902 = vadd.f32 %v898, 1e-05
        %v903 = vadd.f32 %v899, 1e-05
        %v904 = vadd.f32 %v900, 1e-05
        %v905 = vrsqrt.pop %v901
        %v906 = vrsqrt.pop %v902
        %v907 = vrsqrt.pop %v903
        %v908 = vrsqrt.pop %v904
        %v909 = vmul.f32 %v881, %v905
        %v910 = vmul.f32 %v882, %v906
        %v911 = vmul.f32 %v883, %v907
        %v912 = vmul.f32 %v884, %v908
        %v913 = vld [vmem:[%s5] sm:$0x1]
        %v915 = vlaneseq
        %v916 = vshrl.u32 %v915, 7
        %v917 = vsub.s32 0, %v916
        %v918 = vrot.slane %v913, %v917
        %v920 = vmul.f32 %v909, %v918
        %v921 = vmul.f32 %v910, %v918
        %v922 = vmul.f32 %v911, %v918
        %v923 = vmul.f32 %v912, %v918
        %v924 = vld [vmem:[%s6] sm:$0x1]
        %v926 = vlaneseq
        %v927 = vshrl.u32 %v926, 7
        %v928 = vsub.s32 0, %v927
        %v929 = vrot.slane %v924, %v928
        %v931 = vadd.f32 %v920, %v929
        %v932 = vadd.f32 %v921, %v929
        %v933 = vadd.f32 %v922, %v929
        %v934 = vadd.f32 %v923, %v929
        %935 = vst [vmem:[%s408] sm:$0xff] %v931
        %936 = vst [vmem:[%s408 + $0x8] sm:$0xff] %v932
        %937 = vst [vmem:[%s408 + $0x10] sm:$0xff] %v933
        %938 = vst [vmem:[%s408 + $0x18] sm:$0xff] %v934
        %s939 = sand.u32 %s218, 1
        %s940 = scalar_lea.sflag [#allocation5], %s939
        %s941 = sand.u32 %s218, 1
        %s942 = smul.addr %s941, 32
        %s943 = scalar_lea.vmem [#allocation11], %s942
        // Predicated region
        $region65: #{tpu_custom_call.1} parent=47 // pred_check
          %p944 = pneg %p228
        $region66: #{tpu_custom_call.1} parent=47 // pred_check_branch
          %946 = sbr.rel (%p944) target = $region68
        $region67: #{tpu_custom_call.1} parent=47 // pred_region
          %s947 = smul.u32 4, %s33
          %s949 = ssub.s32 512, 512
          %950 = vsyncadd %s940, %s949
          %s951 = smul.addr %s32, 8
          %s952 = sadd.s32 %s947, %s951
          %s953 = smul.addr %s952, 128
          %s954 = scalar_lea.hbm %s7, %s953
          %s955 = sshll.u32 %s943, 4
          %s956 = int_to_ptr.vmem [resolvable:$true] %s955
          %961 = dma.vmem_to_hbm [thread:$0]  %s956, 512, %s954, %s940, 128, 128, 8
        $region68: #{tpu_custom_call.1} parent=47 // pred_fallthru
          _
      $region48: #{tpu_custom_call.1} parent=5 // pred_fallthru
        _
      %p962 = scmp.le.s32.totalorder 2, %s23
      // Predicated region
      $region69: #{tpu_custom_call.1} parent=5 // pred_check
        %p963 = pneg %p962
      $region70: #{tpu_custom_call.1} parent=5 // pred_check_branch
        %965 = sbr.rel (%p963) target = $region72
      $region71: #{tpu_custom_call.1} parent=5 // pred_region
        %s966 = ssub.s32 %s23, 2
        // Predicated region
        $region73: #{tpu_custom_call.1} parent=71 // pred_check
          %p967 = pneg %p234
        $region74: #{tpu_custom_call.1} parent=71 // pred_check_branch
          %969 = sbr.rel (%p967) target = $region76
        $region75: #{tpu_custom_call.1} parent=71 // pred_region
          %s970 = sand.u32 %s219, 1
          %s971 = scalar_lea.sflag [#allocation5], %s970
          %s972 = sand.u32 %s219, 1
          %s973 = smul.addr %s972, 32
          %s974 = scalar_lea.vmem [#allocation11], %s973
          %975 = dma.done %s971, 512
        $region76: #{tpu_custom_call.1} parent=71 // pred_fallthru
          _
      $region72: #{tpu_custom_call.1} parent=5 // pred_fallthru
        _
    $region6: #{tpu_custom_call.1} parent=1 // loop_footer
      %s27 = sadd.s32 1, %s23
    $region7: #{tpu_custom_call.1} parent=1 // loop_footer_branch
      %22 = sbr.rel target = $region3
    $region8: #{tpu_custom_call.1} parent=1 // loop_exit
      _
    %976 = vsyncpa [#allocation4], 1
    %s977 = scalar_lea.sflag [#allocation4], 1
    %978 = vsyncpa %s977, 1
    %979 = vsyncpa [#allocation7], 1
    %s980 = scalar_lea.sflag [#allocation7], 1
    %981 = vsyncpa %s980, 1
    %982 = vsyncpa [#allocation10], 1
    %983 = vsyncpa [#allocation5], 1
    %s984 = scalar_lea.sflag [#allocation5], 1
    %985 = vsyncpa %s984, 1

</llo_original>
